<compile_context>
chip_gen: v5e
topology: v5e:2x2
jax: 0.10.0
libtpu: 0.0.40
codegen_flags: <defaults>
</compile_context>

<pallas_src>
import math

import jax
import jax.numpy as jnp
from jax import lax
from jax.experimental import pallas as pl
from jax.experimental.pallas import tpu as pltpu


def _embed_pos_kernel(ids_ref, pe_ref, emb_ref, out_ref):
    # ids_ref : (N, 1) int32   N = S*B, row n corresponds to (s = n//B, b = n%B)
    # pe_ref  : (N, D) f32     positional row pe[s] repeated B times (wrapper)
    # emb_ref : (V, D) f32     embedding table (whole table resident in VMEM)
    # out_ref : (N, D) f32     lane-dense output (D is a multiple of 128)
    ids = ids_ref[...]                                         # (N, 1)
    n = ids.shape[0]
    v = emb_ref.shape[0]
    # One-hot gather realized on the MXU: build (N, V) on the VPU, one matmul.
    lane_iota = lax.broadcasted_iota(jnp.int32, (n, v), 1)     # (N, V)
    onehot = (ids == lane_iota).astype(emb_ref.dtype)          # (N, V)
    gathered = jnp.dot(onehot, emb_ref[...],
                       preferred_element_type=jnp.float32)     # (N, D) MXU
    # Single broadcast add of the positional encoding, single full-vreg store.
    out_ref[...] = (gathered + pe_ref[...]).astype(out_ref.dtype)


@jax.jit
def embedding_with_pos(ids_seq, emb_table, pe):
    """ids_seq: (S, B) int; emb_table: (V, D) f32; pe: (max_len, D) f32.

    Returns (S, B, D) f32 = emb_table[ids_seq] + pe[:S][:, None, :].
    """
    S, B = ids_seq.shape
    V, D = emb_table.shape
    # Clamp ids to match jnp gather semantics (out-of-range ids clamp instead
    # of silently producing a zero row through the one-hot).
    ids_flat = jnp.clip(ids_seq.astype(jnp.int32), 0, V - 1).reshape(S * B, 1)
    # Wrapper-side layout plumbing (cheap): pe row s repeated for every b so
    # the in-kernel add is one vectorized op over the lane-dense output block.
    pe_rep = jnp.repeat(pe[:S].astype(emb_table.dtype), B, axis=0)  # (S*B, D)

    out2d = pl.pallas_call(
        _embed_pos_kernel,
        out_shape=jax.ShapeDtypeStruct((S * B, D), emb_table.dtype),
        # No grid: one invocation, whole arrays staged into VMEM exactly once.
        in_specs=[
            pl.BlockSpec(memory_space=pltpu.MemorySpace.VMEM),  # ids (N,1)
            pl.BlockSpec(memory_space=pltpu.MemorySpace.VMEM),  # pe  (N,D)
            pl.BlockSpec(memory_space=pltpu.MemorySpace.VMEM),  # emb (V,D)
        ],
        out_specs=pl.BlockSpec(memory_space=pltpu.MemorySpace.VMEM),
    )(ids_flat, pe_rep, emb_table)
    return out2d.reshape(S, B, D)


def make_positional_encoding(d_model: int, max_len: int) -> jnp.ndarray:
    """Replicates PositionalEncoding.pe (as (max_len, d_model))."""
    position = jnp.arange(max_len, dtype=jnp.float32)[:, None]           # (L, 1)
    div_term = jnp.exp(jnp.arange(0, d_model, 2, dtype=jnp.float32)
                       * (-math.log(10000.0) / d_model))
    pe = jnp.zeros((max_len, d_model), dtype=jnp.float32)
    pe = pe.at[:, 0::2].set(jnp.sin(position * div_term))
    if d_model % 2 == 0:
        pe = pe.at[:, 1::2].set(jnp.cos(position * div_term))
    else:
        pe = pe.at[:, 1::2].set(jnp.cos(position * div_term[:-1]))
    return pe


if __name__ == "__main__":
    # Small shapes consistent with the module.  D = 128 keeps the kernel's
    # output lane-dense (full 128-lane vregs) without any in-kernel relayout.
    char_vocab_size = 64      # shared vocab for key / char embeddings
    key_emb_size = 128        # D for the encoder key-embedding path
    char_emb_size = 128       # D for the decoder char-embedding path
    max_curves_seq_len = 16
    max_out_seq_len = 16
    curve_seq_len = 8         # S for the encode() key path
    out_seq_len = 8           # S for the decode() char path
    batch = 4

    key = jax.random.PRNGKey(0)
    k_kb, k_y, k_kemb, k_cemb = jax.random.split(key, 4)

    # nn.Embedding default init is N(0, 1)
    key_emb_table = jax.random.normal(k_kemb, (char_vocab_size, key_emb_size),
                                      dtype=jnp.float32)
    char_emb_table = jax.random.normal(k_cemb, (char_vocab_size, char_emb_size),
                                       dtype=jnp.float32)
    key_pe = make_positional_encoding(key_emb_size, max_curves_seq_len)
    char_pe = make_positional_encoding(char_emb_size, max_out_seq_len)

    kb_tokens = jax.random.randint(k_kb, (curve_seq_len, batch),
                                   0, char_vocab_size, jnp.int32)
    y_tokens = jax.random.randint(k_y, (out_seq_len, batch),
                                  0, char_vocab_size, jnp.int32)

    # encode(): key_embedding -> key_embedding_dropout(id) -> key_pos_encoder
    kb_k_emb = embedding_with_pos(kb_tokens, key_emb_table, key_pe)
    # decode(): char_embedding -> char_embedding_dropout(id) -> char_pos_encoder
    ch_emb = embedding_with_pos(y_tokens, char_emb_table, char_pe)
    kb_k_emb, ch_emb = jax.block_until_ready((kb_k_emb, ch_emb))

    # pure-JAX references
    ref_kb = key_emb_table[kb_tokens] + key_pe[:curve_seq_len][:, None, :]
    ref_ch = char_emb_table[y_tokens] + char_pe[:out_seq_len][:, None, :]

    assert kb_k_emb.shape == (curve_seq_len, batch, key_emb_size)
    assert ch_emb.shape == (out_seq_len, batch, char_emb_size)
    assert jnp.allclose(kb_k_emb, ref_kb, atol=1e-5, rtol=1e-5), "key path mismatch"
    assert jnp.allclose(ch_emb, ref_ch, atol=1e-5, rtol=1e-5), "char path mismatch"

    print("KERNEL_OK")
</pallas_src>

<mosaic_0001>
module attributes {stable_mosaic.version = 11 : i64} {
  func.func @_embed_pos_kernel(%arg0: memref<32x1xi32, #tpu.memory_space<vmem>>, %arg1: memref<32x128xf32, #tpu.memory_space<vmem>>, %arg2: memref<64x128xf32, #tpu.memory_space<vmem>>, %arg3: memref<32x128xf32, #tpu.memory_space<vmem>>) attributes {dimension_semantics = [], scalar_prefetch = 0 : i64, scratch_operands = 0 : i64, tpu.core_type = #tpu.core_type<tc>} {
    %c0 = arith.constant 0 : index
    %c0_0 = arith.constant 0 : index
    %0 = vector.load %arg0[%c0, %c0_0] : memref<32x1xi32, #tpu.memory_space<vmem>>, vector<32x1xi32>
    %1 = tpu.iota {dimensions = array<i32: 1>} : vector<32x64xi32>
    %2 = vector.broadcast %0 : vector<32x1xi32> to vector<32x64xi32>
    %3 = arith.cmpi eq, %2, %1 : vector<32x64xi32>
    %4 = arith.extui %3 : vector<32x64xi1> to vector<32x64xi32>
    %5 = arith.sitofp %4 : vector<32x64xi32> to vector<32x64xf32>
    %c0_1 = arith.constant 0 : index
    %c0_2 = arith.constant 0 : index
    %6 = vector.load %arg2[%c0_1, %c0_2] : memref<64x128xf32, #tpu.memory_space<vmem>>, vector<64x128xf32>
    %cst = arith.constant dense<0.000000e+00> : vector<32x128xf32>
    %7 = tpu.matmul %5, %6, %cst {dimension_numbers = #tpu.dot_dimension_numbers<[1], [0], [0], [1], [0, 0, 1, 1], [], []>} : vector<32x64xf32>, vector<64x128xf32>, vector<32x128xf32> -> vector<32x128xf32>
    %c0_3 = arith.constant 0 : index
    %c0_4 = arith.constant 0 : index
    %8 = vector.load %arg1[%c0_3, %c0_4] : memref<32x128xf32, #tpu.memory_space<vmem>>, vector<32x128xf32>
    %9 = arith.addf %7, %8 : vector<32x128xf32>
    %c0_5 = arith.constant 0 : index
    %c0_6 = arith.constant 0 : index
    %10 = vector.load %arg3[%c0_5, %c0_6] : memref<32x128xf32, #tpu.memory_space<vmem>>, vector<32x128xf32>
    tpu.vector_store %arg3[%c0_5, %c0_6], %9 {strides = array<i32>} : memref<32x128xf32, #tpu.memory_space<vmem>>, vector<32x128xf32>,
    return
  }
}

</mosaic_0001>

<llo_original>
// kernel: embedding_with_pos.1
$region0: #{embedding_with_pos.1}
  #allocation0 [shape = 'u32[]', space=smem, size = 0x4, offset = 0x4, fixed_abs, tag = 'smem constant byte address 0x4 - core index']
  #allocation1 [shape = 'u32[72,128]{1,0:T(1,128)}', space=vmem, size = 0x9000, scoped, tag = 'internal scratch']
  %s0 = inlined_call_operand.vmem [shape: s32[32,1], index: 0, kind: input, shape index: {}]
  %s1 = inlined_call_operand.vmem [shape: f32[32,128], index: 1, kind: input, shape index: {}]
  %s2 = inlined_call_operand.vmem [shape: f32[64,128], index: 2, kind: input, shape index: {}]
  %s3 = inlined_call_operand.hbm [shape: f32[32,128], index: 3, kind: output, shape index: {}]
  %s4 = sld [smem:[#allocation0]]
  $region22: #{embedding_with_pos.1} parent=0
    _
  %s6 = ssub.s32 1, %s4
  %s7 = scalar_select 0, %s6, %s4
  $region1: #{embedding_with_pos.1} parent=0
    #allocation2 [shape = 'u8[16384]{0}', space=vmem, size = 0x4000, scoped, tag = 'output window, operand 0, single buffered']
    #allocation3 [shape = 's32[1]{0}', space=sflag, size = 0x4, scoped, tag = 'scoped memory for embedding_with_pos.1']
    %8 = vsyncpa [#allocation3], 0
    // Predicated region
    $region2: #{embedding_with_pos.1} parent=1 // pred_check
      _
    $region3: #{embedding_with_pos.1} parent=1 // pred_check_branch
      %10 = sbr.rel (0) target = $region5
    $region4: #{embedding_with_pos.1} parent=1 // pred_region
      _
    $region5: #{embedding_with_pos.1} parent=1 // pred_fallthru
      _
    // Predicated region
    $region6: #{embedding_with_pos.1} parent=1 // pred_check
      _
    $region7: #{embedding_with_pos.1} parent=1 // pred_check_branch
      %12 = sbr.rel (0) target = $region9
    $region8: #{embedding_with_pos.1} parent=1 // pred_region
      _
    $region9: #{embedding_with_pos.1} parent=1 // pred_fallthru
      _
    // Predicated region
    $region10: #{embedding_with_pos.1} parent=1 // pred_check
      _
    $region11: #{embedding_with_pos.1} parent=1 // pred_check_branch
      %14 = sbr.rel (0) target = $region13
    $region12: #{embedding_with_pos.1} parent=1 // pred_region
      _
    $region13: #{embedding_with_pos.1} parent=1 // pred_fallthru
      _
    %v15 = vld [vmem:[%s0] sm:$0xff]
    %v16 = vld [vmem:[%s0 + $0x8] sm:$0xff]
    %v17 = vld [vmem:[%s0 + $0x10] sm:$0xff]
    %v18 = vld [vmem:[%s0 + $0x18] sm:$0xff]
    %v19 = vlaneseq
    %v20 = vand.u32 %v19, 127
    %21 = vset.pattern.permute.xlu0 0
    %22 = vperm.xlu0 %21, %v15
    %v23 = vpop.permute.xlu0 %22
    %24 = vset.pattern.permute.xlu0 0
    %25 = vperm.xlu0 %24, %v16
    %v26 = vpop.permute.xlu0 %25
    %27 = vset.pattern.permute.xlu0 0
    %28 = vperm.xlu0 %27, %v17
    %v29 = vpop.permute.xlu0 %28
    %30 = vset.pattern.permute.xlu0 0
    %31 = vperm.xlu0 %30, %v18
    %v32 = vpop.permute.xlu0 %31
    %vm33 = vcmp.eq.s32.totalorder %v23, %v20
    %vm34 = vcmp.eq.s32.totalorder %v26, %v20
    %vm35 = vcmp.eq.s32.totalorder %v29, %v20
    %vm36 = vcmp.eq.s32.totalorder %v32, %v20
    %v37 = vsel %vm33, 1, 0
    %v38 = vsel %vm34, 1, 0
    %v39 = vsel %vm35, 1, 0
    %v40 = vsel %vm36, 1, 0
    %v41 = vcvt.s32.f32 %v37
    %v42 = vcvt.s32.f32 %v38
    %v43 = vcvt.s32.f32 %v39
    %v44 = vcvt.s32.f32 %v40
    %v45 = vld [vmem:[%s2] sm:$0xff]
    %v46 = vld [vmem:[%s2 + $0x8] sm:$0xff]
    %v47 = vld [vmem:[%s2 + $0x10] sm:$0xff]
    %v48 = vld [vmem:[%s2 + $0x18] sm:$0xff]
    %v49 = vld [vmem:[%s2 + $0x20] sm:$0xff]
    %v50 = vld [vmem:[%s2 + $0x28] sm:$0xff]
    %v51 = vld [vmem:[%s2 + $0x30] sm:$0xff]
    %v52 = vld [vmem:[%s2 + $0x38] sm:$0xff]
    %v53 = vld [vmem:[%s1] sm:$0xff]
    %v54 = vld [vmem:[%s1 + $0x8] sm:$0xff]
    %v55 = vld [vmem:[%s1 + $0x10] sm:$0xff]
    %v56 = vld [vmem:[%s1 + $0x18] sm:$0xff]
    %vm57 = vcmask 523264
    %v59 = vsel %vm57, %v41, 0
    %v62 = vsel %vm57, %v42, 0
    %v65 = vsel %vm57, %v43, 0
    %v68 = vsel %vm57, %v44, 0
    %70 = vmatpush.msra.mxu0 0.0
    %71 = vmatpush.msra.mxu0 0.0
    %72 = vmatpush.msra.mxu0 0.0
    %73 = vmatpush.msra.mxu0 0.0
    %74 = vmatpush.msra.mxu0 0.0
    %75 = vmatpush.msra.mxu0 0.0
    %76 = vmatpush.msra.mxu0 0.0
    %77 = vmatpush.msra.mxu0 0.0
    %78 = vmatpush.msra.mxu0 %v52
    %79 = vmatpush.msra.mxu0 %v51
    %80 = vmatpush.msra.mxu0 %v50
    %81 = vmatpush.msra.mxu0 %v49
    %82 = vmatpush.msra.mxu0 %v48
    %83 = vmatpush.msra.mxu0 %v47
    %84 = vmatpush.msra.mxu0 %v46
    %85 = vmatpush.msra.mxu0 %v45
    %86 = vmatmul.f32.gmra.mxu0 %v59
    %v87 = vpop.f32.mrf.mxu0
    %v88 = vadd.f32 %v53, %v87
    %89 = vmatmul.f32.gmra.mxu0 %v62
    %v90 = vpop.f32.mrf.mxu0
    %v91 = vadd.f32 %v54, %v90
    %92 = vmatmul.f32.gmra.mxu0 %v65
    %v93 = vpop.f32.mrf.mxu0
    %v94 = vadd.f32 %v55, %v93
    %95 = vmatmul.f32.gmra.mxu0 %v68
    %v96 = vpop.f32.mrf.mxu0
    %v97 = vadd.f32 %v56, %v96
    %98 = vdwg.mxu0
    %99 = vst [vmem:[#allocation2] sm:$0xff] %v88
    %100 = vst [vmem:[#allocation2 + $0x8] sm:$0xff] %v91
    %101 = vst [vmem:[#allocation2 + $0x10] sm:$0xff] %v94
    %102 = vst [vmem:[#allocation2 + $0x18] sm:$0xff] %v97
    // Predicated region
    $region14: #{embedding_with_pos.1} parent=1 // pred_check
      _
    $region15: #{embedding_with_pos.1} parent=1 // pred_check_branch
      %104 = sbr.rel (0) target = $region17
    $region16: #{embedding_with_pos.1} parent=1 // pred_region
      %106 = vsyncadd [#allocation3], 0
      %s107 = sshll.u32 [#allocation2], 4
      %s108 = int_to_ptr.vmem [resolvable:$true] %s107
      %s109 = sshll.u32 %s3, 4
      %s110 = int_to_ptr.hbm [resolvable:$true] %s109
      %115 = dma.vmem_to_hbm [thread:$0]  %s108, 512, %s110, [#allocation3], 128, 128, 8
    $region17: #{embedding_with_pos.1} parent=1 // pred_fallthru
      _
    // Predicated region
    $region18: #{embedding_with_pos.1} parent=1 // pred_check
      _
    $region19: #{embedding_with_pos.1} parent=1 // pred_check_branch
      %117 = sbr.rel (0) target = $region21
    $region20: #{embedding_with_pos.1} parent=1 // pred_region
      %119 = dma.done [#allocation3], 512
    $region21: #{embedding_with_pos.1} parent=1 // pred_fallthru
      _
    %120 = vsyncpa [#allocation3], 1

</llo_original>
